<compile_context>
chip_gen: v7x
topology: tpu7x:2x2x1
jax: 0.10.0
libtpu: 0.0.40
codegen_flags: <defaults>
</compile_context>

<pallas_src>
import functools
import math

import jax
import jax.numpy as jnp
from jax.experimental import pallas as pl
from jax.experimental.pallas import tpu as pltpu


# --------------------------------------------------------------------------
# VMEM budgeting (generation-aware) and byte/dtype-aware tile selection
# --------------------------------------------------------------------------

def _vmem_limit_bytes():
    """VMEM budget: v5e/v6e have 128 MiB, v7x only 64 MiB per TensorCore."""
    try:
        cap = int(pltpu.get_tpu_info().vmem_capacity_bytes)
    except Exception:
        cap = 64 * 1024 * 1024  # conservative: assume v7x-sized VMEM
    return max(32 * 1024 * 1024, min(cap - 16 * 1024 * 1024, 112 * 1024 * 1024))


def _tile_budget_bytes():
    # Leave extra headroom below the compiler limit for Mosaic's internal scratch.
    return _vmem_limit_bytes() - (8 << 20)


def _compiler_params(dims):
    return pltpu.CompilerParams(
        dimension_semantics=dims,
        vmem_limit_bytes=_vmem_limit_bytes(),
    )


def _largest_divisor(dim, unit, cap):
    """Largest multiple of `unit` dividing `dim` with value <= cap, or None."""
    if dim % unit != 0:
        return None
    t = (min(cap, dim) // unit) * unit
    while t >= unit:
        if dim % t == 0:
            return t
        t -= unit
    return None


def _pick_tiles_2d(rows, cols, itemsize, budget_bytes, n_streamed):
    """Byte/dtype-aware (rows, cols) tile for a (rows, cols) streamed array.

    `n_streamed` = number of full-size streamed buffers (each double-buffered by
    the pipeline). Falls back to full-extent blocks (always legal) when a dim has
    no multiple-of-(8|128) divisor, shrinking the other dim to stay in budget."""
    target = max(budget_bytes // (2 * n_streamed + 1), 1 << 20)
    tcols = _largest_divisor(cols, 128, 4096) or cols
    row_cap = max(8, min(target // max(tcols * itemsize, 1), 1024))
    trows = _largest_divisor(rows, 8, row_cap) or rows
    # Keep >=2 blocks on the (parallel) row axis so both v7x TensorCores get work.
    if rows // trows < 2:
        half = _largest_divisor(rows, 8, rows // 2)
        if half is not None:
            trows = half
    return trows, tcols


# --------------------------------------------------------------------------
# Fused kernel: squeeze + excite + scale, one sample per grid step
# --------------------------------------------------------------------------

def _se_fused_kernel(x_ref, w1t_ref, b1_ref, w2t_ref, b2_ref, o_ref, *, inv_hw):
    x = x_ref[0]                                                       # (C, HW), native dtype
    # squeeze: per-channel mean over the lane (spatial) axis, f32 accumulation
    pooled = jnp.sum(x.astype(jnp.float32), axis=1, keepdims=True) * inv_hw     # (C, 1)
    # excite: column-vector matmuls (weights pre-transposed in the wrapper)
    h = jnp.dot(w1t_ref[...], pooled, preferred_element_type=jnp.float32) + b1_ref[...]
    h = jnp.maximum(h, 0.0)                                            # (Cr, 1)
    g = jnp.dot(w2t_ref[...], h, preferred_element_type=jnp.float32) + b2_ref[...]
    g = jax.nn.sigmoid(g)                                              # (C, 1)
    # scale: broadcast multiply in x's native dtype (only the tiny gate is cast)
    o_ref[0] = x * g.astype(x.dtype)


def se_fused(x3d, w1t, b1c, w2t, b2c, *, donate_x=False):
    """x3d: (N, C, HW); w1t: (Cr, C); b1c: (Cr, 1); w2t: (C, Cr); b2c: (C, 1)."""
    N, C, HW = x3d.shape
    Cr = w1t.shape[0]
    return pl.pallas_call(
        functools.partial(_se_fused_kernel, inv_hw=1.0 / HW),
        out_shape=jax.ShapeDtypeStruct((N, C, HW), x3d.dtype),
        grid=(N,),
        in_specs=[
            pl.BlockSpec((1, C, HW), lambda n: (n, 0, 0)),
            pl.BlockSpec((Cr, C), lambda n: (0, 0)),   # constant index -> stays resident
            pl.BlockSpec((Cr, 1), lambda n: (0, 0)),
            pl.BlockSpec((C, Cr), lambda n: (0, 0)),
            pl.BlockSpec((C, 1), lambda n: (0, 0)),
        ],
        out_specs=pl.BlockSpec((1, C, HW), lambda n: (n, 0, 0)),
        input_output_aliases=({0: 0} if donate_x else {}),
        compiler_params=_compiler_params(("parallel",)),
    )(x3d, w1t, b1c, w2t, b2c)


# --------------------------------------------------------------------------
# Fallback path (per-sample slab too big for VMEM): tiled 2-pass kernels
# --------------------------------------------------------------------------

def _row_mean_single_kernel(x_ref, o_ref, *, inv_hw):
    o_ref[...] = jnp.sum(x_ref[...].astype(jnp.float32), axis=1, keepdims=True) * inv_hw


def _row_mean_kernel(x_ref, o_ref, acc_ref, *, inv_hw):
    @pl.when(pl.program_id(1) == 0)
    def _():
        acc_ref[...] = jnp.zeros_like(acc_ref)

    acc_ref[...] += jnp.sum(x_ref[...].astype(jnp.float32), axis=1, keepdims=True)

    @pl.when(pl.program_id(1) == pl.num_programs(1) - 1)
    def _():
        o_ref[...] = acc_ref[...] * inv_hw


def row_mean(x2d, budget):
    """(N*C, HW) -> (N*C, 1) f32 mean over the last (lane) axis."""
    NC, HW = x2d.shape
    itemsize = jnp.dtype(x2d.dtype).itemsize
    tm, thw = _pick_tiles_2d(NC, HW, itemsize, budget, n_streamed=1)
    gk = HW // thw
    if gk == 1:
        return pl.pallas_call(
            functools.partial(_row_mean_single_kernel, inv_hw=1.0 / HW),
            out_shape=jax.ShapeDtypeStruct((NC, 1), jnp.float32),
            grid=(NC // tm,),
            in_specs=[pl.BlockSpec((tm, HW), lambda i: (i, 0))],
            out_specs=pl.BlockSpec((tm, 1), lambda i: (i, 0)),
            compiler_params=_compiler_params(("parallel",)),
        )(x2d)
    return pl.pallas_call(
        functools.partial(_row_mean_kernel, inv_hw=1.0 / HW),
        out_shape=jax.ShapeDtypeStruct((NC, 1), jnp.float32),
        grid=(NC // tm, gk),
        in_specs=[pl.BlockSpec((tm, thw), lambda i, k: (i, k))],
        out_specs=pl.BlockSpec((tm, 1), lambda i, k: (i, 0)),
        scratch_shapes=[pltpu.VMEM((tm, 1), jnp.float32)],
        compiler_params=_compiler_params(("parallel", "arbitrary")),
    )(x2d)


def _scale_kernel(x_ref, g_ref, o_ref):
    # Multiply in x's native dtype; only the (tm, 1) gate tile gets cast.
    o_ref[...] = x_ref[...] * g_ref[...].astype(o_ref.dtype)


def scale_rows(x2d, gate_col, budget, *, donate_x=False):
    """(N*C, HW) * (N*C, 1) broadcast multiply, lane-dense output tiles."""
    NC, HW = x2d.shape
    itemsize = jnp.dtype(x2d.dtype).itemsize
    tm, thw = _pick_tiles_2d(NC, HW, itemsize, budget, n_streamed=2)
    return pl.pallas_call(
        _scale_kernel,
        out_shape=jax.ShapeDtypeStruct((NC, HW), x2d.dtype),
        grid=(NC // tm, HW // thw),
        in_specs=[
            pl.BlockSpec((tm, thw), lambda i, j: (i, j)),
            pl.BlockSpec((tm, 1), lambda i, j: (i, 0)),
        ],
        out_specs=pl.BlockSpec((tm, thw), lambda i, j: (i, j)),
        input_output_aliases=({0: 0} if donate_x else {}),
        compiler_params=_compiler_params(("parallel", "parallel")),
    )(x2d, gate_col)


# --------------------------------------------------------------------------
# SEModule forward
# --------------------------------------------------------------------------

def se_module(x_nchw, w1, b1, w2, b2, *, force_fallback=False, donate_x=False):
    """SEModule.forward: x * sigmoid(fc2(relu(fc1(avg_pool(x))))), NCHW in/out.

    w1: (C, C/r), b1: (1, C/r), w2: (C/r, C), b2: (1, C)  (1x1 convs as matrices).
    Set donate_x=True only when the caller does not reuse x (aliases out onto x)."""
    N, C, H, W = x_nchw.shape
    HW = H * W
    itemsize = jnp.dtype(x_nchw.dtype).itemsize
    budget = _tile_budget_bytes()

    # Fused single-pass path needs 2 double-buffered (C, HW) slabs (+ tiny weights).
    slab_bytes = C * HW * itemsize
    weight_bytes = 4 * (w1.size + b1.size + w2.size + b2.size)
    use_fused = (not force_fallback) and (
        4 * slab_bytes + 2 * weight_bytes + (2 << 20) <= budget
    )

    if use_fused:
        x3d = x_nchw.reshape(N, C, HW)          # contiguous view, no copy
        out3d = se_fused(
            x3d,
            w1.T, b1.reshape(-1, 1),            # tiny transposes, done once in XLA
            w2.T, b2.reshape(-1, 1),
            donate_x=donate_x,
        )
        return out3d.reshape(N, C, H, W)

    # Fallback: 2 passes over x with byte-aware tiles; the ~KFLOP gate matmuls are
    # plain jnp in the wrapper (no dedicated pallas_call overhead, no MXU waste).
    x2d = x_nchw.reshape(N * C, HW)
    pooled = row_mean(x2d, budget).reshape(N, C)                 # (N, C) f32
    hidden = jnp.maximum(pooled @ w1 + b1, 0.0)
    gate = jax.nn.sigmoid(hidden @ w2 + b2)                      # (N, C) f32
    out2d = scale_rows(x2d, gate.reshape(N * C, 1), budget, donate_x=donate_x)
    return out2d.reshape(N, C, H, W)


def make_params(key, channels, reduction):
    """fc1/fc2 are 1x1 convs (with bias) -> plain (Cin, Cout) matrices here."""
    cr = channels // reduction
    k1, k2, k3, k4 = jax.random.split(key, 4)
    bnd1 = 1.0 / math.sqrt(channels)
    bnd2 = 1.0 / math.sqrt(cr)
    w1 = jax.random.uniform(k1, (channels, cr), jnp.float32, -bnd1, bnd1)
    b1 = jax.random.uniform(k2, (1, cr), jnp.float32, -bnd1, bnd1)
    w2 = jax.random.uniform(k3, (cr, channels), jnp.float32, -bnd2, bnd2)
    b2 = jax.random.uniform(k4, (1, channels), jnp.float32, -bnd2, bnd2)
    return w1, b1, w2, b2


if __name__ == "__main__":
    key = jax.random.PRNGKey(0)
    pkey, xkey = jax.random.split(key)
    N, C, H, W, reduction = 2, 128, 16, 16, 16
    w1, b1, w2, b2 = make_params(pkey, C, reduction)
    x = jax.random.normal(xkey, (N, C, H, W), jnp.float32)

    # pure-JAX reference (same math as the PyTorch module)
    s = jnp.mean(x, axis=(2, 3))
    h = jnp.maximum(s @ w1 + b1, 0.0)
    g = jax.nn.sigmoid(h @ w2 + b2)
    ref = x * g[:, :, None, None]

    # fused single-pass path (default for VMEM-resident per-sample slabs)
    out = jax.block_until_ready(jax.jit(se_module)(x, w1, b1, w2, b2))
    assert out.shape == (N, C, H, W)
    assert bool(jnp.all(jnp.isfinite(out)))
    assert bool(jnp.allclose(out, ref, rtol=1e-5, atol=1e-5))

    # also exercise the tiled fallback path (used when a per-sample slab exceeds VMEM)
    fb = jax.jit(functools.partial(se_module, force_fallback=True))
    out_fb = jax.block_until_ready(fb(x, w1, b1, w2, b2))
    assert bool(jnp.allclose(out_fb, ref, rtol=1e-5, atol=1e-5))

    print("KERNEL_OK")
</pallas_src>

<mosaic_0001>
module attributes {stable_mosaic.version = 11 : i64} {
  func.func @_se_fused_kernel(%arg0: i32, %arg1: memref<1x128x256xf32, #tpu.memory_space<vmem>>, %arg2: memref<8x128xf32, #tpu.memory_space<vmem>>, %arg3: memref<8x1xf32, #tpu.memory_space<vmem>>, %arg4: memref<128x8xf32, #tpu.memory_space<vmem>>, %arg5: memref<128x1xf32, #tpu.memory_space<vmem>>, %arg6: memref<1x128x256xf32, #tpu.memory_space<vmem>>) attributes {dimension_semantics = [#tpu.dimension_semantics<parallel>], iteration_bounds = array<i64: 2>, scalar_prefetch = 0 : i64, scratch_operands = 0 : i64, tpu.core_type = #tpu.core_type<tc>, window_params = [{transform_indices = @transform_0, window_bounds = array<i64: 1, 128, 256>}, {pipeline_mode = #tpu.pipeline_mode<synchronous>, transform_indices = @transform_1, window_bounds = array<i64: 8, 128>}, {pipeline_mode = #tpu.pipeline_mode<synchronous>, transform_indices = @transform_2, window_bounds = array<i64: 8, 1>}, {pipeline_mode = #tpu.pipeline_mode<synchronous>, transform_indices = @transform_3, window_bounds = array<i64: 128, 8>}, {pipeline_mode = #tpu.pipeline_mode<synchronous>, transform_indices = @transform_4, window_bounds = array<i64: 128, 1>}, {transform_indices = @transform_5, window_bounds = array<i64: 1, 128, 256>}]} {
    %c0 = arith.constant 0 : index
    %c0_0 = arith.constant 0 : index
    %c0_1 = arith.constant 0 : index
    %0 = vector.load %arg1[%c0, %c0_0, %c0_1] : memref<1x128x256xf32, #tpu.memory_space<vmem>>, vector<1x128x256xf32>
    %1 = vector.shape_cast %0 : vector<1x128x256xf32> to vector<128x256xf32>
    %cst = arith.constant dense<0.000000e+00> : vector<128xf32>
    %2 = vector.multi_reduction <add>, %1, %cst [1] : vector<128x256xf32> to vector<128xf32>
    %3 = vector.shape_cast %2 : vector<128xf32> to vector<128x1xf32>
    %cst_2 = arith.constant 3.906250e-03 : f32
    %4 = vector.broadcast %cst_2 : f32 to vector<128x1xf32>
    %5 = arith.mulf %3, %4 : vector<128x1xf32>
    %c0_3 = arith.constant 0 : index
    %c0_4 = arith.constant 0 : index
    %6 = vector.load %arg2[%c0_3, %c0_4] : memref<8x128xf32, #tpu.memory_space<vmem>>, vector<8x128xf32>
    %cst_5 = arith.constant dense<0.000000e+00> : vector<8x1xf32>
    %7 = tpu.matmul %6, %5, %cst_5 {dimension_numbers = #tpu.dot_dimension_numbers<[1], [0], [0], [1], [0, 0, 1, 1], [], []>} : vector<8x128xf32>, vector<128x1xf32>, vector<8x1xf32> -> vector<8x1xf32>
    %c0_6 = arith.constant 0 : index
    %c0_7 = arith.constant 0 : index
    %8 = vector.load %arg3[%c0_6, %c0_7] : memref<8x1xf32, #tpu.memory_space<vmem>>, vector<8x1xf32>
    %9 = arith.addf %7, %8 : vector<8x1xf32>
    %cst_8 = arith.constant 0.000000e+00 : f32
    %10 = vector.broadcast %cst_8 : f32 to vector<8x1xf32>
    %11 = arith.maximumf %9, %10 : vector<8x1xf32>
    %c0_9 = arith.constant 0 : index
    %c0_10 = arith.constant 0 : index
    %12 = vector.load %arg4[%c0_9, %c0_10] : memref<128x8xf32, #tpu.memory_space<vmem>>, vector<128x8xf32>
    %cst_11 = arith.constant dense<0.000000e+00> : vector<128x1xf32>
    %13 = tpu.matmul %12, %11, %cst_11 {dimension_numbers = #tpu.dot_dimension_numbers<[1], [0], [0], [1], [0, 0, 1, 1], [], []>} : vector<128x8xf32>, vector<8x1xf32>, vector<128x1xf32> -> vector<128x1xf32>
    %c0_12 = arith.constant 0 : index
    %c0_13 = arith.constant 0 : index
    %14 = vector.load %arg5[%c0_12, %c0_13] : memref<128x1xf32, #tpu.memory_space<vmem>>, vector<128x1xf32>
    %15 = arith.addf %13, %14 : vector<128x1xf32>
    %16 = arith.negf %15 : vector<128x1xf32>
    %17 = math.exp %16 : vector<128x1xf32>
    %cst_14 = arith.constant 1.000000e+00 : f32
    %18 = vector.broadcast %cst_14 : f32 to vector<128x1xf32>
    %19 = arith.addf %18, %17 : vector<128x1xf32>
    %20 = arith.divf %18, %19 : vector<128x1xf32>
    %21 = vector.broadcast %20 : vector<128x1xf32> to vector<128x256xf32>
    %22 = arith.mulf %1, %21 : vector<128x256xf32>
    %c0_15 = arith.constant 0 : index
    %c0_16 = arith.constant 0 : index
    %c0_17 = arith.constant 0 : index
    %23 = vector.load %arg6[%c0_15, %c0_16, %c0_17] : memref<1x128x256xf32, #tpu.memory_space<vmem>>, vector<1x128x256xf32>
    %24 = vector.shape_cast %23 : vector<1x128x256xf32> to vector<128x256xf32>
    %25 = vector.shape_cast %22 : vector<128x256xf32> to vector<1x128x256xf32>
    tpu.vector_store %arg6[%c0_15, %c0_16, %c0_17], %25 {strides = array<i32>} : memref<1x128x256xf32, #tpu.memory_space<vmem>>, vector<1x128x256xf32>,
    return
  }
  func.func @transform_0(%arg0: i32) -> (i32, i32, i32) {
    %c0_i32 = arith.constant 0 : i32
    %c0_i32_0 = arith.constant 0 : i32
    %c0_i32_1 = arith.constant 0 : i32
    return %arg0, %c0_i32, %c0_i32_0 : i32, i32, i32
  }
  func.func @transform_1(%arg0: i32) -> (i32, i32) {
    %c0_i32 = arith.constant 0 : i32
    %c0_i32_0 = arith.constant 0 : i32
    %c0_i32_1 = arith.constant 0 : i32
    return %c0_i32, %c0_i32_0 : i32, i32
  }
  func.func @transform_2(%arg0: i32) -> (i32, i32) {
    %c0_i32 = arith.constant 0 : i32
    %c0_i32_0 = arith.constant 0 : i32
    %c0_i32_1 = arith.constant 0 : i32
    return %c0_i32, %c0_i32_0 : i32, i32
  }
  func.func @transform_3(%arg0: i32) -> (i32, i32) {
    %c0_i32 = arith.constant 0 : i32
    %c0_i32_0 = arith.constant 0 : i32
    %c0_i32_1 = arith.constant 0 : i32
    return %c0_i32, %c0_i32_0 : i32, i32
  }
  func.func @transform_4(%arg0: i32) -> (i32, i32) {
    %c0_i32 = arith.constant 0 : i32
    %c0_i32_0 = arith.constant 0 : i32
    %c0_i32_1 = arith.constant 0 : i32
    return %c0_i32, %c0_i32_0 : i32, i32
  }
  func.func @transform_5(%arg0: i32) -> (i32, i32, i32) {
    %c0_i32 = arith.constant 0 : i32
    %c0_i32_0 = arith.constant 0 : i32
    %c0_i32_1 = arith.constant 0 : i32
    return %arg0, %c0_i32, %c0_i32_0 : i32, i32, i32
  }
}

</mosaic_0001>

<llo_original>
// kernel: se_module.1
$region0: #{se_module.1}
  #allocation0 [shape = 'u32[]', space=smem, size = 0x4, offset = 0x4, fixed_abs, tag = 'smem constant byte address 0x4 - core index']
  #allocation1 [shape = 'u32[144,128]{1,0:T(1,128)}', space=vmem, size = 0x12000, scoped, tag = 'internal scratch']
  %s0 = inlined_call_operand.vmem [shape: f32[2,128,256], index: 0, kind: input, shape index: {}]
  %s1 = inlined_call_operand.vmem [shape: f32[8,128], index: 1, kind: input, shape index: {}]
  %s2 = inlined_call_operand.vmem [shape: f32[8,1], index: 2, kind: input, shape index: {}]
  %s3 = inlined_call_operand.vmem [shape: f32[128,8], index: 3, kind: input, shape index: {}]
  %s4 = inlined_call_operand.vmem [shape: f32[128,1], index: 4, kind: input, shape index: {}]
  %s5 = inlined_call_operand.vmem [shape: f32[2,128,256], index: 5, kind: output, shape index: {}]
  %s6 = sld [smem:[#allocation0]]
  $region53: #{se_module.1} parent=0
    _
  %s8 = ssub.s32 1, %s6
  %s9 = scalar_select 0, %s8, %s6
  loop: start=0, step=1, limit=4
  $region2: #{se_module.1} parent=0 // loop_pre_header
    _
  $region3: #{se_module.1} parent=0 // loop_header
    %s11 = sphi 0, %s15
    %p12 = scmp.ge.s32.totalorder %s11, 4
    %s21 = sphi 0, %s23
    %s24 = sphi 0, %s21
    %s25 = sphi 0, %s24
    %s41 = sphi 0, %s25
    %s45 = sphi 0, %s45
    %s47 = sphi 0, %s45
    %s48 = sphi 0, %s47
    %s62 = sphi 0, %s48
    %s66 = sphi 0, %s66
    %s68 = sphi 0, %s66
    %s69 = sphi 0, %s68
    %s83 = sphi 0, %s69
    %s87 = sphi 0, %s87
    %s89 = sphi 0, %s87
    %s90 = sphi 0, %s89
    %s104 = sphi 0, %s90
    %s108 = sphi 0, %s108
    %s110 = sphi 0, %s108
    %s111 = sphi 0, %s110
    %s125 = sphi 0, %s111
    %s131 = sphi 0, %s133
    %s134 = sphi 0, %s131
    %s135 = sphi 0, %s134
    %s151 = sphi 0, %s135
  $region4: #{se_module.1} parent=0 // loop_header_branch
    %14 = sbr.rel (%p12) target = $region8
  $region5: #{se_module.1} parent=0 // loop_body
    %s16 = ssub.s32 %s11, 1
    %s17 = ssub.s32 %s11, 2
    %s18 = sadd.s32 %s11, 1
    %s19 = ssub.s32 %s11, %s18
    %p20 = scmp.eq.s32.totalorder %s19, 0
    %s22 = sadd.s32 %s21, 1
    %s23 = scalar_select %p20, %s21, %s22
    %p26 = pneg %p20
    %p27 = scmp.eq.s32.totalorder %s11, 1
    %p28 = por %p26, %p27
    %p29 = scmp.ne.s32.totalorder %s21, %s24
    %p30 = scmp.eq.s32.totalorder %s11, 0
    %p31 = por %p29, %p30
    %p32 = scmp.ne.s32.totalorder %s21, %s24
    %p33 = scmp.eq.s32.totalorder %s16, 1
    %p34 = por %p32, %p33
    %p35 = scmp.ne.s32.totalorder %s24, %s25
    %p36 = scmp.eq.s32.totalorder %s16, 0
    %p37 = por %p35, %p36
    %p38 = scmp.ne.s32.totalorder %s24, %s25
    %p39 = scmp.eq.s32.totalorder %s17, 1
    %p40 = por %p38, %p39
    %p42 = scmp.ne.s32.totalorder %s25, %s41
    %p43 = scmp.eq.s32.totalorder %s17, 0
    %p44 = por %p42, %p43
    %s46 = sadd.s32 %s45, 1
    %p49 = scmp.eq.s32.totalorder %s11, 1
    %p50 = scmp.ne.s32.totalorder %s45, %s47
    %p51 = scmp.eq.s32.totalorder %s11, 0
    %p52 = por %p50, %p51
    %p53 = scmp.ne.s32.totalorder %s45, %s47
    %p54 = scmp.eq.s32.totalorder %s16, 1
    %p55 = por %p53, %p54
    %p56 = scmp.ne.s32.totalorder %s47, %s48
    %p57 = scmp.eq.s32.totalorder %s16, 0
    %p58 = por %p56, %p57
    %p59 = scmp.ne.s32.totalorder %s47, %s48
    %p60 = scmp.eq.s32.totalorder %s17, 1
    %p61 = por %p59, %p60
    %p63 = scmp.ne.s32.totalorder %s48, %s62
    %p64 = scmp.eq.s32.totalorder %s17, 0
    %p65 = por %p63, %p64
    %s67 = sadd.s32 %s66, 1
    %p70 = scmp.eq.s32.totalorder %s11, 1
    %p71 = scmp.ne.s32.totalorder %s66, %s68
    %p72 = scmp.eq.s32.totalorder %s11, 0
    %p73 = por %p71, %p72
    %p74 = scmp.ne.s32.totalorder %s66, %s68
    %p75 = scmp.eq.s32.totalorder %s16, 1
    %p76 = por %p74, %p75
    %p77 = scmp.ne.s32.totalorder %s68, %s69
    %p78 = scmp.eq.s32.totalorder %s16, 0
    %p79 = por %p77, %p78
    %p80 = scmp.ne.s32.totalorder %s68, %s69
    %p81 = scmp.eq.s32.totalorder %s17, 1
    %p82 = por %p80, %p81
    %p84 = scmp.ne.s32.totalorder %s69, %s83
    %p85 = scmp.eq.s32.totalorder %s17, 0
    %p86 = por %p84, %p85
    %s88 = sadd.s32 %s87, 1
    %p91 = scmp.eq.s32.totalorder %s11, 1
    %p92 = scmp.ne.s32.totalorder %s87, %s89
    %p93 = scmp.eq.s32.totalorder %s11, 0
    %p94 = por %p92, %p93
    %p95 = scmp.ne.s32.totalorder %s87, %s89
    %p96 = scmp.eq.s32.totalorder %s16, 1
    %p97 = por %p95, %p96
    %p98 = scmp.ne.s32.totalorder %s89, %s90
    %p99 = scmp.eq.s32.totalorder %s16, 0
    %p100 = por %p98, %p99
    %p101 = scmp.ne.s32.totalorder %s89, %s90
    %p102 = scmp.eq.s32.totalorder %s17, 1
    %p103 = por %p101, %p102
    %p105 = scmp.ne.s32.totalorder %s90, %s104
    %p106 = scmp.eq.s32.totalorder %s17, 0
    %p107 = por %p105, %p106
    %s109 = sadd.s32 %s108, 1
    %p112 = scmp.eq.s32.totalorder %s11, 1
    %p113 = scmp.ne.s32.totalorder %s108, %s110
    %p114 = scmp.eq.s32.totalorder %s11, 0
    %p115 = por %p113, %p114
    %p116 = scmp.ne.s32.totalorder %s108, %s110
    %p117 = scmp.eq.s32.totalorder %s16, 1
    %p118 = por %p116, %p117
    %p119 = scmp.ne.s32.totalorder %s110, %s111
    %p120 = scmp.eq.s32.totalorder %s16, 0
    %p121 = por %p119, %p120
    %p122 = scmp.ne.s32.totalorder %s110, %s111
    %p123 = scmp.eq.s32.totalorder %s17, 1
    %p124 = por %p122, %p123
    %p126 = scmp.ne.s32.totalorder %s111, %s125
    %p127 = scmp.eq.s32.totalorder %s17, 0
    %p128 = por %p126, %p127
    %s129 = ssub.s32 %s11, %s18
    %p130 = scmp.eq.s32.totalorder %s129, 0
    %s132 = sadd.s32 %s131, 1
    %s133 = scalar_select %p130, %s131, %s132
    %p136 = pneg %p130
    %p137 = scmp.eq.s32.totalorder %s11, 1
    %p138 = por %p136, %p137
    %p139 = scmp.ne.s32.totalorder %s131, %s134
    %p140 = scmp.eq.s32.totalorder %s11, 0
    %p141 = por %p139, %p140
    %p142 = scmp.ne.s32.totalorder %s131, %s134
    %p143 = scmp.eq.s32.totalorder %s16, 1
    %p144 = por %p142, %p143
    %p145 = scmp.ne.s32.totalorder %s134, %s135
    %p146 = scmp.eq.s32.totalorder %s16, 0
    %p147 = por %p145, %p146
    %p148 = scmp.ne.s32.totalorder %s134, %s135
    %p149 = scmp.eq.s32.totalorder %s17, 1
    %p150 = por %p148, %p149
    %p152 = scmp.ne.s32.totalorder %s135, %s151
    %p153 = scmp.eq.s32.totalorder %s17, 0
    %p154 = por %p152, %p153
    %p155 = scmp.le.s32.totalorder 1, %s11
    %p156 = scmp.lt.s32.totalorder %s11, 3
    %p157 = pnand %p155, %p156
    %p158 = pneg %p157
    // Predicated region
    $region9: #{se_module.1} parent=5 // pred_check
      _
    $region10: #{se_module.1} parent=5 // pred_check_branch
      %160 = sbr.rel (%p157) target = $region12
    $region11: #{se_module.1} parent=5 // pred_region
      %s161 = ssub.s32 %s11, 1
      // Predicated region
      $region13: #{se_module.1} parent=11 // pred_check
        %p162 = pneg %p58
      $region14: #{se_module.1} parent=11 // pred_check_branch
        %164 = sbr.rel (%p162) target = $region16
      $region15: #{se_module.1} parent=11 // pred_region
        _
      $region16: #{se_module.1} parent=11 // pred_fallthru
        _
      // Predicated region
      $region17: #{se_module.1} parent=11 // pred_check
        %p165 = pneg %p79
      $region18: #{se_module.1} parent=11 // pred_check_branch
        %167 = sbr.rel (%p165) target = $region20
      $region19: #{se_module.1} parent=11 // pred_region
        _
      $region20: #{se_module.1} parent=11 // pred_fallthru
        _
      // Predicated region
      $region21: #{se_module.1} parent=11 // pred_check
        %p168 = pneg %p100
      $region22: #{se_module.1} parent=11 // pred_check_branch
        %170 = sbr.rel (%p168) target = $region24
      $region23: #{se_module.1} parent=11 // pred_region
        _
      $region24: #{se_module.1} parent=11 // pred_fallthru
        _
      // Predicated region
      $region25: #{se_module.1} parent=11 // pred_check
        %p171 = pneg %p121
      $region26: #{se_module.1} parent=11 // pred_check_branch
        %173 = sbr.rel (%p171) target = $region28
      $region27: #{se_module.1} parent=11 // pred_region
        _
      $region28: #{se_module.1} parent=11 // pred_fallthru
        _
    $region12: #{se_module.1} parent=5 // pred_fallthru
      _
    %p174 = scmp.lt.s32.totalorder %s11, 2
    // Predicated region
    $region29: #{se_module.1} parent=5 // pred_check
      %p175 = pneg %p174
    $region30: #{se_module.1} parent=5 // pred_check_branch
      %177 = sbr.rel (%p175) target = $region32
    $region31: #{se_module.1} parent=5 // pred_region
      // Predicated region
      $region33: #{se_module.1} parent=31 // pred_check
        %p178 = pneg %p31
      $region34: #{se_module.1} parent=31 // pred_check_branch
        %180 = sbr.rel (%p178) target = $region36
      $region35: #{se_module.1} parent=31 // pred_region
        %p181 = scmp.lt.s32.totalorder %s11, 1
        %s182 = scalar_select %p181, %s11, 1
        %s183 = smul.addr %s182, 32
        %s184 = smul.addr %s183, 8
        %s185 = scalar_lea.vmem %s0, %s184
      $region36: #{se_module.1} parent=31 // pred_fallthru
        _
    $region32: #{se_module.1} parent=5 // pred_fallthru
      _
    %p186 = scmp.le.s32.totalorder 1, %s11
    %p187 = scmp.lt.s32.totalorder %s11, 3
    %p188 = pnand %p186, %p187
    %p189 = pneg %p188
    // Predicated region
    $region37: #{se_module.1} parent=5 // pred_check
      _
    $region38: #{se_module.1} parent=5 // pred_check_branch
      %191 = sbr.rel (%p188) target = $region40
    $region39: #{se_module.1} parent=5 // pred_region
      %s192 = ssub.s32 %s11, 1
      %p193 = scmp.lt.s32.totalorder %s16, 1
      %s194 = scalar_select %p193, %s16, 1
      %s195 = smul.addr %s194, 32
      %s196 = smul.addr %s195, 8
      %s197 = scalar_lea.vmem %s0, %s196
      %p198 = pneg %p37
      %p199 = pneg %p34
      %p200 = pneg %p58
      %p201 = pneg %p55
      %p202 = pneg %p79
      %p203 = pneg %p76
      %p204 = pneg %p100
      %p205 = pneg %p97
      %p206 = pneg %p121
      %p207 = pneg %p118
      %p208 = pneg %p147
      %p209 = pneg %p144
      %p210 = scmp.lt.s32.totalorder %s16, 1
      %s211 = scalar_select %p210, %s16, 1
      %s212 = smul.addr %s211, 32
      %s213 = smul.addr %s212, 8
      %s214 = scalar_lea.vmem %s5, %s213
      %p215 = scmp.lt.s32.totalorder %s16, 1
      %s216 = scalar_select %p215, %s16, 1
      %s217 = smul.addr %s216, 32
      %s218 = smul.addr %s217, 8
      %s219 = scalar_lea.vmem %s0, %s218
      %p220 = scmp.lt.s32.totalorder %s16, 1
      %s221 = scalar_select %p220, %s16, 1
      %s222 = smul.addr %s221, 32
      %s223 = smul.addr %s222, 8
      %s224 = scalar_lea.vmem %s5, %s223
      %v225 = vld [vmem:[%s219] sm:$0xff]
      %v226 = vld [vmem:[%s219 + $0x8] sm:$0xff]
      %v227 = vld [vmem:[%s219 + $0x10] sm:$0xff]
      %v228 = vld [vmem:[%s219 + $0x18] sm:$0xff]
      %v229 = vld [vmem:[%s219 + $0x20] sm:$0xff]
      %v230 = vld [vmem:[%s219 + $0x28] sm:$0xff]
      %v231 = vld [vmem:[%s219 + $0x30] sm:$0xff]
      %v232 = vld [vmem:[%s219 + $0x38] sm:$0xff]
      %v233 = vld [vmem:[%s219 + $0x40] sm:$0xff]
      %v234 = vld [vmem:[%s219 + $0x48] sm:$0xff]
      %v235 = vld [vmem:[%s219 + $0x50] sm:$0xff]
      %v236 = vld [vmem:[%s219 + $0x58] sm:$0xff]
      %v237 = vld [vmem:[%s219 + $0x60] sm:$0xff]
      %v238 = vld [vmem:[%s219 + $0x68] sm:$0xff]
      %v239 = vld [vmem:[%s219 + $0x70] sm:$0xff]
      %v240 = vld [vmem:[%s219 + $0x78] sm:$0xff]
      %v241 = vld [vmem:[%s219 + $0x80] sm:$0xff]
      %v242 = vld [vmem:[%s219 + $0x88] sm:$0xff]
      %v243 = vld [vmem:[%s219 + $0x90] sm:$0xff]
      %v244 = vld [vmem:[%s219 + $0x98] sm:$0xff]
      %v245 = vld [vmem:[%s219 + $0xa0] sm:$0xff]
      %v246 = vld [vmem:[%s219 + $0xa8] sm:$0xff]
      %v247 = vld [vmem:[%s219 + $0xb0] sm:$0xff]
      %v248 = vld [vmem:[%s219 + $0xb8] sm:$0xff]
      %v249 = vld [vmem:[%s219 + $0xc0] sm:$0xff]
      %v250 = vld [vmem:[%s219 + $0xc8] sm:$0xff]
      %v251 = vld [vmem:[%s219 + $0xd0] sm:$0xff]
      %v252 = vld [vmem:[%s219 + $0xd8] sm:$0xff]
      %v253 = vld [vmem:[%s219 + $0xe0] sm:$0xff]
      %v254 = vld [vmem:[%s219 + $0xe8] sm:$0xff]
      %v255 = vld [vmem:[%s219 + $0xf0] sm:$0xff]
      %v256 = vld [vmem:[%s219 + $0xf8] sm:$0xff]
      %v257 = vadd.f32 %v225, %v226
      %258 = vadd.xlane.f32.xlu0 %v257
      %v259 = vpop.xlane.xlu0 %258
      %v260 = vadd.f32 %v227, %v228
      %261 = vadd.xlane.f32.xlu0 %v260
      %v262 = vpop.xlane.xlu0 %261
      %v263 = vadd.f32 %v229, %v230
      %264 = vadd.xlane.f32.xlu0 %v263
      %v265 = vpop.xlane.xlu0 %264
      %v266 = vadd.f32 %v231, %v232
      %267 = vadd.xlane.f32.xlu0 %v266
      %v268 = vpop.xlane.xlu0 %267
      %v269 = vadd.f32 %v233, %v234
      %270 = vadd.xlane.f32.xlu0 %v269
      %v271 = vpop.xlane.xlu0 %270
      %v272 = vadd.f32 %v235, %v236
      %273 = vadd.xlane.f32.xlu0 %v272
      %v274 = vpop.xlane.xlu0 %273
      %v275 = vadd.f32 %v237, %v238
      %276 = vadd.xlane.f32.xlu0 %v275
      %v277 = vpop.xlane.xlu0 %276
      %v278 = vadd.f32 %v239, %v240
      %279 = vadd.xlane.f32.xlu0 %v278
      %v280 = vpop.xlane.xlu0 %279
      %v281 = vadd.f32 %v241, %v242
      %282 = vadd.xlane.f32.xlu0 %v281
      %v283 = vpop.xlane.xlu0 %282
      %v284 = vadd.f32 %v243, %v244
      %285 = vadd.xlane.f32.xlu0 %v284
      %v286 = vpop.xlane.xlu0 %285
      %v287 = vadd.f32 %v245, %v246
      %288 = vadd.xlane.f32.xlu0 %v287
      %v289 = vpop.xlane.xlu0 %288
      %v290 = vadd.f32 %v247, %v248
      %291 = vadd.xlane.f32.xlu0 %v290
      %v292 = vpop.xlane.xlu0 %291
      %v293 = vadd.f32 %v249, %v250
      %294 = vadd.xlane.f32.xlu0 %v293
      %v295 = vpop.xlane.xlu0 %294
      %v296 = vadd.f32 %v251, %v252
      %297 = vadd.xlane.f32.xlu0 %v296
      %v298 = vpop.xlane.xlu0 %297
      %v299 = vadd.f32 %v253, %v254
      %300 = vadd.xlane.f32.xlu0 %v299
      %v301 = vpop.xlane.xlu0 %300
      %v302 = vadd.f32 %v255, %v256
      %303 = vadd.xlane.f32.xlu0 %v302
      %v304 = vpop.xlane.xlu0 %303
      %v305 = vmul.f32 %v259, 0.00390625
      %v306 = vmul.f32 %v262, 0.00390625
      %v307 = vmul.f32 %v265, 0.00390625
      %v308 = vmul.f32 %v268, 0.00390625
      %v309 = vmul.f32 %v271, 0.00390625
      %v310 = vmul.f32 %v274, 0.00390625
      %v311 = vmul.f32 %v277, 0.00390625
      %v312 = vmul.f32 %v280, 0.00390625
      %v313 = vmul.f32 %v283, 0.00390625
      %v314 = vmul.f32 %v286, 0.00390625
      %v315 = vmul.f32 %v289, 0.00390625
      %v316 = vmul.f32 %v292, 0.00390625
      %v317 = vmul.f32 %v295, 0.00390625
      %v318 = vmul.f32 %v298, 0.00390625
      %v319 = vmul.f32 %v301, 0.00390625
      %v320 = vmul.f32 %v304, 0.00390625
      %v321 = vld [vmem:[%s1] sm:$0xff]
      %v322 = vld [vmem:[%s2] sm:$0xff]
      %323 = vmatprep.subr.mxu0 0.0
      %324 = vmatpush1.msra.mxu0 %v305
      %325 = vmatprep.subr.mxu0 0.0
      %326 = vmatpush1.msra.mxu0 %v306
      %327 = vmatprep.subr.mxu0 0.0
      %328 = vmatpush1.msra.mxu0 %v307
      %329 = vmatprep.subr.mxu0 0.0
      %330 = vmatpush1.msra.mxu0 %v308
      %331 = vmatprep.subr.mxu0 0.0
      %332 = vmatpush1.msra.mxu0 %v309
      %333 = vmatprep.subr.mxu0 0.0
      %334 = vmatpush1.msra.mxu0 %v310
      %335 = vmatprep.subr.mxu0 0.0
      %336 = vmatpush1.msra.mxu0 %v311
      %337 = vmatprep.subr.mxu0 0.0
      %338 = vmatpush1.msra.mxu0 %v312
      %339 = vmatprep.subr.mxu0 0.0
      %340 = vmatpush1.msra.mxu0 %v313
      %341 = vmatprep.subr.mxu0 0.0
      %342 = vmatpush1.msra.mxu0 %v314
      %343 = vmatprep.subr.mxu0 0.0
      %344 = vmatpush1.msra.mxu0 %v315
      %345 = vmatprep.subr.mxu0 0.0
      %346 = vmatpush1.msra.mxu0 %v316
      %347 = vmatprep.subr.mxu0 0.0
      %348 = vmatpush1.msra.mxu0 %v317
      %349 = vmatprep.subr.mxu0 0.0
      %350 = vmatpush1.msra.mxu0 %v318
      %351 = vmatprep.subr.mxu0 0.0
      %352 = vmatpush1.msra.mxu0 %v319
      %353 = vmatprep.subr.mxu0 0.0
      %354 = vmatpush1.msra.mxu0 %v320
      %355 = vmatprep.subr.mxu0 0.0
      %356 = vmatpush1.msra.mxu0 0.0
      %357 = vmatprep.subr.mxu0 0.0
      %358 = vmatpush1.msra.mxu0 0.0
      %359 = vmatprep.subr.mxu0 0.0
      %360 = vmatpush1.msra.mxu0 0.0
      %361 = vmatprep.subr.mxu0 0.0
      %362 = vmatpush1.msra.mxu0 0.0
      %363 = vmatprep.subr.mxu0 0.0
      %364 = vmatpush1.msra.mxu0 0.0
      %365 = vmatprep.subr.mxu0 0.0
      %366 = vmatpush1.msra.mxu0 0.0
      %367 = vmatprep.subr.mxu0 0.0
      %368 = vmatpush1.msra.mxu0 0.0
      %369 = vmatprep.subr.mxu0 0.0
      %370 = vmatpush1.msra.mxu0 0.0
      %371 = vmatprep.subr.mxu0 0.0
      %372 = vmatpush1.msra.mxu0 0.0
      %373 = vmatprep.subr.mxu0 0.0
      %374 = vmatpush1.msra.mxu0 0.0
      %375 = vmatprep.subr.mxu0 0.0
      %376 = vmatpush1.msra.mxu0 0.0
      %377 = vmatprep.subr.mxu0 0.0
      %378 = vmatpush1.msra.mxu0 0.0
      %379 = vmatprep.subr.mxu0 0.0
      %380 = vmatpush1.msra.mxu0 0.0
      %381 = vmatprep.subr.mxu0 0.0
      %382 = vmatpush1.msra.mxu0 0.0
      %383 = vmatprep.subr.mxu0 0.0
      %384 = vmatpush1.msra.mxu0 0.0
      %385 = vmatprep.subr.mxu0 0.0
      %386 = vmatpush1.msra.mxu0 0.0
      %387 = vmatprep.mubr.f32.mxu0 0.0
      %388 = vmatmul.mubr.f32.gmra.mrb[0].mxu0 %v321
      %v389 = vpop.f32.mrb[0].mxu0
      %v390 = vadd.f32 %v322, %v389
      %v391 = vpop.f32.mrb[0].mxu0
      %392 = vdwg.mxu0
      %v393 = vmax.f32 %v390, 0.0
      %v394 = vld [vmem:[%s3] sm:$0xff]
      %v395 = vld [vmem:[%s3 + $0x8] sm:$0xff]
      %v396 = vld [vmem:[%s3 + $0x10] sm:$0xff]
      %v397 = vld [vmem:[%s3 + $0x18] sm:$0xff]
      %v398 = vld [vmem:[%s3 + $0x20] sm:$0xff]
      %v399 = vld [vmem:[%s3 + $0x28] sm:$0xff]
      %v400 = vld [vmem:[%s3 + $0x30] sm:$0xff]
      %v401 = vld [vmem:[%s3 + $0x38] sm:$0xff]
      %v402 = vld [vmem:[%s3 + $0x40] sm:$0xff]
      %v403 = vld [vmem:[%s3 + $0x48] sm:$0xff]
      %v404 = vld [vmem:[%s3 + $0x50] sm:$0xff]
      %v405 = vld [vmem:[%s3 + $0x58] sm:$0xff]
      %v406 = vld [vmem:[%s3 + $0x60] sm:$0xff]
      %v407 = vld [vmem:[%s3 + $0x68] sm:$0xff]
      %v408 = vld [vmem:[%s3 + $0x70] sm:$0xff]
      %v409 = vld [vmem:[%s3 + $0x78] sm:$0xff]
      %v410 = vld [vmem:[%s4] sm:$0xff]
      %v411 = vld [vmem:[%s4 + $0x8] sm:$0xff]
      %v412 = vld [vmem:[%s4 + $0x10] sm:$0xff]
      %v413 = vld [vmem:[%s4 + $0x18] sm:$0xff]
      %v414 = vld [vmem:[%s4 + $0x20] sm:$0xff]
      %v415 = vld [vmem:[%s4 + $0x28] sm:$0xff]
      %v416 = vld [vmem:[%s4 + $0x30] sm:$0xff]
      %v417 = vld [vmem:[%s4 + $0x38] sm:$0xff]
      %v418 = vld [vmem:[%s4 + $0x40] sm:$0xff]
      %v419 = vld [vmem:[%s4 + $0x48] sm:$0xff]
      %v420 = vld [vmem:[%s4 + $0x50] sm:$0xff]
      %v421 = vld [vmem:[%s4 + $0x58] sm:$0xff]
      %v422 = vld [vmem:[%s4 + $0x60] sm:$0xff]
      %v423 = vld [vmem:[%s4 + $0x68] sm:$0xff]
      %v424 = vld [vmem:[%s4 + $0x70] sm:$0xff]
      %v425 = vld [vmem:[%s4 + $0x78] sm:$0xff]
      %vm426 = vcmask 64512
      %v428 = vsel %vm426, %v394, 0
      %v431 = vsel %vm426, %v395, 0
      %v434 = vsel %vm426, %v396, 0
      %v437 = vsel %vm426, %v397, 0
      %v440 = vsel %vm426, %v398, 0
      %v443 = vsel %vm426, %v399, 0
      %v446 = vsel %vm426, %v400, 0
      %v449 = vsel %vm426, %v401, 0
      %v452 = vsel %vm426, %v402, 0
      %v455 = vsel %vm426, %v403, 0
      %v458 = vsel %vm426, %v404, 0
      %v461 = vsel %vm426, %v405, 0
      %v464 = vsel %vm426, %v406, 0
      %v467 = vsel %vm426, %v407, 0
      %v470 = vsel %vm426, %v408, 0
      %v473 = vsel %vm426, %v409, 0
      %475 = vmatprep.subr.mxu0 0.0
      %476 = vmatpush1.msra.mxu0 %v393
      %477 = vmatprep.subr.mxu0 0.0
      %478 = vmatpush1.msra.mxu0 0.0
      %479 = vmatprep.subr.mxu0 0.0
      %480 = vmatpush1.msra.mxu0 0.0
      %481 = vmatprep.subr.mxu0 0.0
      %482 = vmatpush1.msra.mxu0 0.0
      %483 = vmatprep.subr.mxu0 0.0
      %484 = vmatpush1.msra.mxu0 0.0
      %485 = vmatprep.subr.mxu0 0.0
      %486 = vmatpush1.msra.mxu0 0.0
      %487 = vmatprep.subr.mxu0 0.0
      %488 = vmatpush1.msra.mxu0 0.0
      %489 = vmatprep.subr.mxu0 0.0
      %490 = vmatpush1.msra.mxu0 0.0
      %491 = vmatprep.subr.mxu0 0.0
      %492 = vmatpush1.msra.mxu0 0.0
      %493 = vmatprep.subr.mxu0 0.0
      %494 = vmatpush1.msra.mxu0 0.0
      %495 = vmatprep.subr.mxu0 0.0
      %496 = vmatpush1.msra.mxu0 0.0
      %497 = vmatprep.subr.mxu0 0.0
      %498 = vmatpush1.msra.mxu0 0.0
      %499 = vmatprep.subr.mxu0 0.0
      %500 = vmatpush1.msra.mxu0 0.0
      %501 = vmatprep.subr.mxu0 0.0
      %502 = vmatpush1.msra.mxu0 0.0
      %503 = vmatprep.subr.mxu0 0.0
      %504 = vmatpush1.msra.mxu0 0.0
      %505 = vmatprep.subr.mxu0 0.0
      %506 = vmatpush1.msra.mxu0 0.0
      %507 = vmatprep.subr.mxu0 0.0
      %508 = vmatpush1.msra.mxu0 0.0
      %509 = vmatprep.subr.mxu0 0.0
      %510 = vmatpush1.msra.mxu0 0.0
      %511 = vmatprep.subr.mxu0 0.0
      %512 = vmatpush1.msra.mxu0 0.0
      %513 = vmatprep.subr.mxu0 0.0
      %514 = vmatpush1.msra.mxu0 0.0
      %515 = vmatprep.subr.mxu0 0.0
      %516 = vmatpush1.msra.mxu0 0.0
      %517 = vmatprep.subr.mxu0 0.0
      %518 = vmatpush1.msra.mxu0 0.0
      %519 = vmatprep.subr.mxu0 0.0
      %520 = vmatpush1.msra.mxu0 0.0
      %521 = vmatprep.subr.mxu0 0.0
      %522 = vmatpush1.msra.mxu0 0.0
      %523 = vmatprep.subr.mxu0 0.0
      %524 = vmatpush1.msra.mxu0 0.0
      %525 = vmatprep.subr.mxu0 0.0
      %526 = vmatpush1.msra.mxu0 0.0
      %527 = vmatprep.subr.mxu0 0.0
      %528 = vmatpush1.msra.mxu0 0.0
      %529 = vmatprep.subr.mxu0 0.0
      %530 = vmatpush1.msra.mxu0 0.0
      %531 = vmatprep.subr.mxu0 0.0
      %532 = vmatpush1.msra.mxu0 0.0
      %533 = vmatprep.subr.mxu0 0.0
      %534 = vmatpush1.msra.mxu0 0.0
      %535 = vmatprep.subr.mxu0 0.0
      %536 = vmatpush1.msra.mxu0 0.0
      %537 = vmatprep.subr.mxu0 0.0
      %538 = vmatpush1.msra.mxu0 0.0
      %539 = vmatprep.mubr.f32.mxu0 0.0
      %540 = vmatmul.mubr.f32.gmra.mrb[0].mxu0 %v428
      %v541 = vpop.f32.mrb[0].mxu0
      %v542 = vadd.f32 %v410, %v541
      %v543 = vpop.f32.mrb[0].mxu0
      %544 = vmatprep.mubr.f32.mxu0 0.0
      %545 = vmatmul.mubr.f32.gmra.mrb[0].mxu0 %v431
      %v546 = vpop.f32.mrb[0].mxu0
      %v547 = vadd.f32 %v411, %v546
      %v548 = vpop.f32.mrb[0].mxu0
      %549 = vmatprep.mubr.f32.mxu0 0.0
      %550 = vmatmul.mubr.f32.gmra.mrb[0].mxu0 %v434
      %v551 = vpop.f32.mrb[0].mxu0
      %v552 = vadd.f32 %v412, %v551
      %v553 = vpop.f32.mrb[0].mxu0
      %554 = vmatprep.mubr.f32.mxu0 0.0
      %555 = vmatmul.mubr.f32.gmra.mrb[0].mxu0 %v437
      %v556 = vpop.f32.mrb[0].mxu0
      %v557 = vadd.f32 %v413, %v556
      %v558 = vpop.f32.mrb[0].mxu0
      %559 = vmatprep.mubr.f32.mxu0 0.0
      %560 = vmatmul.mubr.f32.gmra.mrb[0].mxu0 %v440
      %v561 = vpop.f32.mrb[0].mxu0
      %v562 = vadd.f32 %v414, %v561
      %v563 = vpop.f32.mrb[0].mxu0
      %564 = vmatprep.mubr.f32.mxu0 0.0
      %565 = vmatmul.mubr.f32.gmra.mrb[0].mxu0 %v443
      %v566 = vpop.f32.mrb[0].mxu0
      %v567 = vadd.f32 %v415, %v566
      %v568 = vpop.f32.mrb[0].mxu0
      %569 = vmatprep.mubr.f32.mxu0 0.0
      %570 = vmatmul.mubr.f32.gmra.mrb[0].mxu0 %v446
      %v571 = vpop.f32.mrb[0].mxu0
      %v572 = vadd.f32 %v416, %v571
      %v573 = vpop.f32.mrb[0].mxu0
      %574 = vmatprep.mubr.f32.mxu0 0.0
      %575 = vmatmul.mubr.f32.gmra.mrb[0].mxu0 %v449
      %v576 = vpop.f32.mrb[0].mxu0
      %v577 = vadd.f32 %v417, %v576
      %v578 = vpop.f32.mrb[0].mxu0
      %579 = vmatprep.mubr.f32.mxu0 0.0
      %580 = vmatmul.mubr.f32.gmra.mrb[0].mxu0 %v452
      %v581 = vpop.f32.mrb[0].mxu0
      %v582 = vadd.f32 %v418, %v581
      %v583 = vpop.f32.mrb[0].mxu0
      %584 = vmatprep.mubr.f32.mxu0 0.0
      %585 = vmatmul.mubr.f32.gmra.mrb[0].mxu0 %v455
      %v586 = vpop.f32.mrb[0].mxu0
      %v587 = vadd.f32 %v419, %v586
      %v588 = vpop.f32.mrb[0].mxu0
      %589 = vmatprep.mubr.f32.mxu0 0.0
      %590 = vmatmul.mubr.f32.gmra.mrb[0].mxu0 %v458
      %v591 = vpop.f32.mrb[0].mxu0
      %v592 = vadd.f32 %v420, %v591
      %v593 = vpop.f32.mrb[0].mxu0
      %594 = vmatprep.mubr.f32.mxu0 0.0
      %595 = vmatmul.mubr.f32.gmra.mrb[0].mxu0 %v461
      %v596 = vpop.f32.mrb[0].mxu0
      %v597 = vadd.f32 %v421, %v596
      %v598 = vpop.f32.mrb[0].mxu0
      %599 = vmatprep.mubr.f32.mxu0 0.0
      %600 = vmatmul.mubr.f32.gmra.mrb[0].mxu0 %v464
      %v601 = vpop.f32.mrb[0].mxu0
      %v602 = vadd.f32 %v422, %v601
      %v603 = vpop.f32.mrb[0].mxu0
      %604 = vmatprep.mubr.f32.mxu0 0.0
      %605 = vmatmul.mubr.f32.gmra.mrb[0].mxu0 %v467
      %v606 = vpop.f32.mrb[0].mxu0
      %v607 = vadd.f32 %v423, %v606
      %v608 = vpop.f32.mrb[0].mxu0
      %609 = vmatprep.mubr.f32.mxu0 0.0
      %610 = vmatmul.mubr.f32.gmra.mrb[0].mxu0 %v470
      %v611 = vpop.f32.mrb[0].mxu0
      %v612 = vadd.f32 %v424, %v611
      %v613 = vpop.f32.mrb[0].mxu0
      %614 = vmatprep.mubr.f32.mxu0 0.0
      %615 = vmatmul.mubr.f32.gmra.mrb[0].mxu0 %v473
      %v616 = vpop.f32.mrb[0].mxu0
      %v617 = vadd.f32 %v425, %v616
      %v618 = vpop.f32.mrb[0].mxu0
      %619 = vdwg.mxu0
      %v620 = vxor.u32 %v542, 2147483648
      %v621 = vxor.u32 %v547, 2147483648
      %v622 = vxor.u32 %v552, 2147483648
      %v623 = vxor.u32 %v557, 2147483648
      %v624 = vxor.u32 %v562, 2147483648
      %v625 = vxor.u32 %v567, 2147483648
      %v626 = vxor.u32 %v572, 2147483648
      %v627 = vxor.u32 %v577, 2147483648
      %v628 = vxor.u32 %v582, 2147483648
      %v629 = vxor.u32 %v587, 2147483648
      %v630 = vxor.u32 %v592, 2147483648
      %v631 = vxor.u32 %v597, 2147483648
      %v632 = vxor.u32 %v602, 2147483648
      %v633 = vxor.u32 %v607, 2147483648
      %v634 = vxor.u32 %v612, 2147483648
      %v635 = vxor.u32 %v617, 2147483648
      %v636 = vmul.f32 %v620, 1.442695
      %v637 = vpow.pop %v636
      %v638 = vmul.f32 %v621, 1.442695
      %v639 = vpow.pop %v638
      %v640 = vmul.f32 %v622, 1.442695
      %v641 = vpow.pop %v640
      %v642 = vmul.f32 %v623, 1.442695
      %v643 = vpow.pop %v642
      %v644 = vmul.f32 %v624, 1.442695
      %v645 = vpow.pop %v644
      %v646 = vmul.f32 %v625, 1.442695
      %v647 = vpow.pop %v646
      %v648 = vmul.f32 %v626, 1.442695
      %v649 = vpow.pop %v648
      %v650 = vmul.f32 %v627, 1.442695
      %v651 = vpow.pop %v650
      %v652 = vmul.f32 %v628, 1.442695
      %v653 = vpow.pop %v652
      %v654 = vmul.f32 %v629, 1.442695
      %v655 = vpow.pop %v654
      %v656 = vmul.f32 %v630, 1.442695
      %v657 = vpow.pop %v656
      %v658 = vmul.f32 %v631, 1.442695
      %v659 = vpow.pop %v658
      %v660 = vmul.f32 %v632, 1.442695
      %v661 = vpow.pop %v660
      %v662 = vmul.f32 %v633, 1.442695
      %v663 = vpow.pop %v662
      %v664 = vmul.f32 %v634, 1.442695
      %v665 = vpow.pop %v664
      %v666 = vmul.f32 %v635, 1.442695
      %v667 = vpow.pop %v666
      %v668 = vadd.f32 %v637, 1.0
      %v669 = vadd.f32 %v639, 1.0
      %v670 = vadd.f32 %v641, 1.0
      %v671 = vadd.f32 %v643, 1.0
      %v672 = vadd.f32 %v645, 1.0
      %v673 = vadd.f32 %v647, 1.0
      %v674 = vadd.f32 %v649, 1.0
      %v675 = vadd.f32 %v651, 1.0
      %v676 = vadd.f32 %v653, 1.0
      %v677 = vadd.f32 %v655, 1.0
      %v678 = vadd.f32 %v657, 1.0
      %v679 = vadd.f32 %v659, 1.0
      %v680 = vadd.f32 %v661, 1.0
      %v681 = vadd.f32 %v663, 1.0
      %v682 = vadd.f32 %v665, 1.0
      %v683 = vadd.f32 %v667, 1.0
      %v684 = vrcp.pop %v668
      %v685 = vmul.f32 1.0, %v684
      %v686 = vrcp.pop %v669
      %v687 = vmul.f32 1.0, %v686
      %v688 = vrcp.pop %v670
      %v689 = vmul.f32 1.0, %v688
      %v690 = vrcp.pop %v671
      %v691 = vmul.f32 1.0, %v690
      %v692 = vrcp.pop %v672
      %v693 = vmul.f32 1.0, %v692
      %v694 = vrcp.pop %v673
      %v695 = vmul.f32 1.0, %v694
      %v696 = vrcp.pop %v674
      %v697 = vmul.f32 1.0, %v696
      %v698 = vrcp.pop %v675
      %v699 = vmul.f32 1.0, %v698
      %v700 = vrcp.pop %v676
      %v701 = vmul.f32 1.0, %v700
      %v702 = vrcp.pop %v677
      %v703 = vmul.f32 1.0, %v702
      %v704 = vrcp.pop %v678
      %v705 = vmul.f32 1.0, %v704
      %v706 = vrcp.pop %v679
      %v707 = vmul.f32 1.0, %v706
      %v708 = vrcp.pop %v680
      %v709 = vmul.f32 1.0, %v708
      %v710 = vrcp.pop %v681
      %v711 = vmul.f32 1.0, %v710
      %v712 = vrcp.pop %v682
      %v713 = vmul.f32 1.0, %v712
      %v714 = vrcp.pop %v683
      %v715 = vmul.f32 1.0, %v714
      %717 = vset.pattern.permute.xlu0 0
      %718 = vperm.xlu0 %717, %v685
      %v719 = vpop.permute.xlu0 %718
      %722 = vset.pattern.permute.xlu0 0
      %723 = vperm.xlu0 %722, %v687
      %v724 = vpop.permute.xlu0 %723
      %727 = vset.pattern.permute.xlu0 0
      %728 = vperm.xlu0 %727, %v689
      %v729 = vpop.permute.xlu0 %728
      %732 = vset.pattern.permute.xlu0 0
      %733 = vperm.xlu0 %732, %v691
      %v734 = vpop.permute.xlu0 %733
      %737 = vset.pattern.permute.xlu0 0
      %738 = vperm.xlu0 %737, %v693
      %v739 = vpop.permute.xlu0 %738
      %742 = vset.pattern.permute.xlu0 0
      %743 = vperm.xlu0 %742, %v695
      %v744 = vpop.permute.xlu0 %743
      %747 = vset.pattern.permute.xlu0 0
      %748 = vperm.xlu0 %747, %v697
      %v749 = vpop.permute.xlu0 %748
      %752 = vset.pattern.permute.xlu0 0
      %753 = vperm.xlu0 %752, %v699
      %v754 = vpop.permute.xlu0 %753
      %757 = vset.pattern.permute.xlu0 0
      %758 = vperm.xlu0 %757, %v701
      %v759 = vpop.permute.xlu0 %758
      %762 = vset.pattern.permute.xlu0 0
      %763 = vperm.xlu0 %762, %v703
      %v764 = vpop.permute.xlu0 %763
      %767 = vset.pattern.permute.xlu0 0
      %768 = vperm.xlu0 %767, %v705
      %v769 = vpop.permute.xlu0 %768
      %772 = vset.pattern.permute.xlu0 0
      %773 = vperm.xlu0 %772, %v707
      %v774 = vpop.permute.xlu0 %773
      %777 = vset.pattern.permute.xlu0 0
      %778 = vperm.xlu0 %777, %v709
      %v779 = vpop.permute.xlu0 %778
      %782 = vset.pattern.permute.xlu0 0
      %783 = vperm.xlu0 %782, %v711
      %v784 = vpop.permute.xlu0 %783
      %787 = vset.pattern.permute.xlu0 0
      %788 = vperm.xlu0 %787, %v713
      %v789 = vpop.permute.xlu0 %788
      %792 = vset.pattern.permute.xlu0 0
      %793 = vperm.xlu0 %792, %v715
      %v794 = vpop.permute.xlu0 %793
      %v796 = vmul.f32 %v225, %v719
      %v797 = vmul.f32 %v226, %v719
      %v798 = vmul.f32 %v227, %v724
      %v799 = vmul.f32 %v228, %v724
      %v800 = vmul.f32 %v229, %v729
      %v801 = vmul.f32 %v230, %v729
      %v802 = vmul.f32 %v231, %v734
      %v803 = vmul.f32 %v232, %v734
      %v804 = vmul.f32 %v233, %v739
      %v805 = vmul.f32 %v234, %v739
      %v806 = vmul.f32 %v235, %v744
      %v807 = vmul.f32 %v236, %v744
      %v808 = vmul.f32 %v237, %v749
      %v809 = vmul.f32 %v238, %v749
      %v810 = vmul.f32 %v239, %v754
      %v811 = vmul.f32 %v240, %v754
      %v812 = vmul.f32 %v241, %v759
      %v813 = vmul.f32 %v242, %v759
      %v814 = vmul.f32 %v243, %v764
      %v815 = vmul.f32 %v244, %v764
      %v816 = vmul.f32 %v245, %v769
      %v817 = vmul.f32 %v246, %v769
      %v818 = vmul.f32 %v247, %v774
      %v819 = vmul.f32 %v248, %v774
      %v820 = vmul.f32 %v249, %v779
      %v821 = vmul.f32 %v250, %v779
      %v822 = vmul.f32 %v251, %v784
      %v823 = vmul.f32 %v252, %v784
      %v824 = vmul.f32 %v253, %v789
      %v825 = vmul.f32 %v254, %v789
      %v826 = vmul.f32 %v255, %v794
      %v827 = vmul.f32 %v256, %v794
      %828 = vst [vmem:[%s224] sm:$0xff] %v796
      %829 = vst [vmem:[%s224 + $0x8] sm:$0xff] %v797
      %830 = vst [vmem:[%s224 + $0x10] sm:$0xff] %v798
      %831 = vst [vmem:[%s224 + $0x18] sm:$0xff] %v799
      %832 = vst [vmem:[%s224 + $0x20] sm:$0xff] %v800
      %833 = vst [vmem:[%s224 + $0x28] sm:$0xff] %v801
      %834 = vst [vmem:[%s224 + $0x30] sm:$0xff] %v802
      %835 = vst [vmem:[%s224 + $0x38] sm:$0xff] %v803
      %836 = vst [vmem:[%s224 + $0x40] sm:$0xff] %v804
      %837 = vst [vmem:[%s224 + $0x48] sm:$0xff] %v805
      %838 = vst [vmem:[%s224 + $0x50] sm:$0xff] %v806
      %839 = vst [vmem:[%s224 + $0x58] sm:$0xff] %v807
      %840 = vst [vmem:[%s224 + $0x60] sm:$0xff] %v808
      %841 = vst [vmem:[%s224 + $0x68] sm:$0xff] %v809
      %842 = vst [vmem:[%s224 + $0x70] sm:$0xff] %v810
      %843 = vst [vmem:[%s224 + $0x78] sm:$0xff] %v811
      %844 = vst [vmem:[%s224 + $0x80] sm:$0xff] %v812
      %845 = vst [vmem:[%s224 + $0x88] sm:$0xff] %v813
      %846 = vst [vmem:[%s224 + $0x90] sm:$0xff] %v814
      %847 = vst [vmem:[%s224 + $0x98] sm:$0xff] %v815
      %848 = vst [vmem:[%s224 + $0xa0] sm:$0xff] %v816
      %849 = vst [vmem:[%s224 + $0xa8] sm:$0xff] %v817
      %850 = vst [vmem:[%s224 + $0xb0] sm:$0xff] %v818
      %851 = vst [vmem:[%s224 + $0xb8] sm:$0xff] %v819
      %852 = vst [vmem:[%s224 + $0xc0] sm:$0xff] %v820
      %853 = vst [vmem:[%s224 + $0xc8] sm:$0xff] %v821
      %854 = vst [vmem:[%s224 + $0xd0] sm:$0xff] %v822
      %855 = vst [vmem:[%s224 + $0xd8] sm:$0xff] %v823
      %856 = vst [vmem:[%s224 + $0xe0] sm:$0xff] %v824
      %857 = vst [vmem:[%s224 + $0xe8] sm:$0xff] %v825
      %858 = vst [vmem:[%s224 + $0xf0] sm:$0xff] %v826
      %859 = vst [vmem:[%s224 + $0xf8] sm:$0xff] %v827
      %p860 = scmp.lt.s32.totalorder %s16, 1
      %s861 = scalar_select %p860, %s16, 1
      %s862 = smul.addr %s861, 32
      %s863 = smul.addr %s862, 8
      %s864 = scalar_lea.vmem %s5, %s863
      // Predicated region
      $region41: #{se_module.1} parent=39 // pred_check
        %p865 = pneg %p144
      $region42: #{se_module.1} parent=39 // pred_check_branch
        %867 = sbr.rel (%p865) target = $region44
      $region43: #{se_module.1} parent=39 // pred_region
        _
      $region44: #{se_module.1} parent=39 // pred_fallthru
        _
    $region40: #{se_module.1} parent=5 // pred_fallthru
      _
    %p868 = scmp.le.s32.totalorder 2, %s11
    // Predicated region
    $region45: #{se_module.1} parent=5 // pred_check
      %p869 = pneg %p868
    $region46: #{se_module.1} parent=5 // pred_check_branch
      %871 = sbr.rel (%p869) target = $region48
    $region47: #{se_module.1} parent=5 // pred_region
      %s872 = ssub.s32 %s11, 2
      // Predicated region
      $region49: #{se_module.1} parent=47 // pred_check
        %p873 = pneg %p150
      $region50: #{se_module.1} parent=47 // pred_check_branch
        %875 = sbr.rel (%p873) target = $region52
      $region51: #{se_module.1} parent=47 // pred_region
        %p876 = scmp.lt.s32.totalorder %s17, 1
        %s877 = scalar_select %p876, %s17, 1
        %s878 = smul.addr %s877, 32
        %s879 = smul.addr %s878, 8
        %s880 = scalar_lea.vmem %s5, %s879
      $region52: #{se_module.1} parent=47 // pred_fallthru
        _
    $region48: #{se_module.1} parent=5 // pred_fallthru
      _
  $region6: #{se_module.1} parent=0 // loop_footer
    %s15 = sadd.s32 1, %s11
  $region7: #{se_module.1} parent=0 // loop_footer_branch
    %10 = sbr.rel target = $region3
  $region8: #{se_module.1} parent=0 // loop_exit
    _

</llo_original>
